<compile_context>
chip_gen: v5e
topology: v5e:2x2
jax: 0.10.0
libtpu: 0.0.40
codegen_flags: <defaults>
</compile_context>

<pallas_src>
import functools
import math

import jax
import jax.numpy as jnp
from jax.experimental import pallas as pl
from jax.experimental.pallas import tpu as pltpu


# ----------------------------------------------------------------------------
# Pallas kernel: fused QKV projection + per-head attention + output projection
# for one (batch element, query tile) grid step.  Heads are a static loop.
# ----------------------------------------------------------------------------
def _mha_kernel(x_ref, wq_ref, bq_ref, wkv_ref, bkv_ref, wo_ref, bo_ref, o_ref,
                *, num_heads, head_dim, q_block, approx_recip):
    # x_ref:   (1, S, E)  full-sequence input rows for this batch element
    # wq_ref:  (E, E)     Q projection (head-major columns, 1/sqrt(D) folded in)
    # bq_ref:  (1, E)     Q bias (f32, scale folded in)
    # wkv_ref: (E, 2E)    [K | V] projections, head-major columns inside each half
    # bkv_ref: (1, 2E)    [K | V] biases (f32)
    # wo_ref:  (E, E)     output projection
    # bo_ref:  (1, E)     output projection bias (f32)
    # o_ref:   (1, tq, E) output rows for this (batch, query-tile)
    qi = pl.program_id(1)
    E = num_heads * head_dim

    x_full = x_ref[0]                                           # (S, E)
    cdt = x_full.dtype
    row0 = pl.multiple_of(qi * q_block, q_block)
    x_q = x_ref[0, pl.ds(row0, q_block), :]                     # (tq, E)

    # K/V for the whole sequence: one matmul, N = 2E (MXU-wide).
    kv = (jnp.dot(x_full, wkv_ref[...], preferred_element_type=jnp.float32)
          + bkv_ref[...]).astype(cdt)                           # (S, 2E)
    # Q for this query tile (already softmax-scaled): one matmul, N = E.
    q = (jnp.dot(x_q, wq_ref[...], preferred_element_type=jnp.float32)
         + bq_ref[...]).astype(cdt)                             # (tq, E)

    ctx_heads = []
    for h in range(num_heads):                                  # static unroll
        d0 = h * head_dim
        q_h = q[:, d0:d0 + head_dim]                            # (tq, D)
        k_h = kv[:, d0:d0 + head_dim]                           # (S, D)
        v_h = kv[:, E + d0:E + d0 + head_dim]                   # (S, D)

        # scores = q_h @ k_h^T  (contract head_dim; no transposed copy)
        s = jax.lax.dot_general(q_h, k_h, (((1,), (1,)), ((), ())),
                                preferred_element_type=jnp.float32)  # (tq, S)
        s = s - jnp.max(s, axis=-1, keepdims=True)
        p = jnp.exp(s)
        denom = jnp.sum(p, axis=-1, keepdims=True)              # (tq, 1)

        # Normalize the context (tq*D mults + EUP reciprocal) instead of the
        # (tq, S) probability matrix (tq*S VPU divides).
        ctx = jnp.dot(p.astype(cdt), v_h, preferred_element_type=jnp.float32)
        ctx = ctx * pl.reciprocal(denom, approx=approx_recip)   # (tq, D) f32
        ctx_heads.append(ctx.astype(cdt))

    ctx_all = jnp.concatenate(ctx_heads, axis=-1)               # (tq, E)

    # Single output projection with K = E (instead of H matmuls with K = D).
    out = (jnp.dot(ctx_all, wo_ref[...], preferred_element_type=jnp.float32)
           + bo_ref[...])                                       # (tq, E) f32
    o_ref[0] = out.astype(o_ref.dtype)


# ----------------------------------------------------------------------------
# Wrapper: host-side weight fusion / re-layout + pallas_call
# ----------------------------------------------------------------------------
def mha_forward(x, wq, bq, wk, bk, wv, bv, wo, bo, *, num_heads,
                compute_dtype=jnp.float32, q_block=None, approx_reciprocal=True):
    """x: (B, S, E); torch-layout Linear params w*: (E, E) = (out, in), b*: (E,)."""
    B, S, E = x.shape
    H = num_heads
    assert E % H == 0, (E, H)
    D = E // H
    scale = 1.0 / math.sqrt(D)

    # Query-tile size: full S by default; for long sequences pick the largest
    # divisor of S that is a multiple of 8 and <= 512 (caps (tq, S) footprint
    # and gives a second parallel grid axis for the 2-TC chips).
    if q_block is None:
        q_block = S
        if S > 1024:
            for cand in range(512, 7, -8):
                if S % cand == 0:
                    q_block = cand
                    break
    assert S % q_block == 0, (S, q_block)
    assert q_block == S or q_block % 8 == 0, q_block
    n_q = S // q_block

    cdt = compute_dtype
    itemsize = jnp.dtype(cdt).itemsize

    # torch Linear: y = x @ W.T + b.  Columns of W.T are already head-major
    # (channel = h*D + d), matching torch's view/permute and the concat of heads.
    wq_m = (wq.T * scale).astype(cdt)                                  # (E, E)
    wkv_m = jnp.concatenate([wk.T, wv.T], axis=1).astype(cdt)          # (E, 2E)
    wo_m = wo.T.astype(cdt)                                            # (E, E)
    bq_m = (bq * scale).reshape(1, E).astype(jnp.float32)
    bkv_m = jnp.concatenate([bk, bv]).reshape(1, 2 * E).astype(jnp.float32)
    bo_m = bo.reshape(1, E).astype(jnp.float32)
    x_c = x.astype(cdt)

    kernel = functools.partial(_mha_kernel, num_heads=H, head_dim=D,
                               q_block=q_block, approx_recip=approx_reciprocal)

    # Advisory cost estimate (matches the resident-weight traffic).
    flops = int(B * n_q * (4 * S * E * E            # K/V projection
                           + 4 * q_block * E * E    # Q + output projection
                           + 4 * q_block * S * E))  # scores + PV over all heads
    transcendentals = int(B * S * S * H)
    bytes_accessed = int(x_c.size * itemsize
                         + (wq_m.size + wkv_m.size + wo_m.size) * itemsize
                         + (bq_m.size + bkv_m.size + bo_m.size) * 4
                         + B * S * E * x.dtype.itemsize)

    # VMEM budget: double-buffered x/out blocks + resident weights + working set.
    vmem_need = (2 * S * E * itemsize                               # x block
                 + 2 * q_block * E * x.dtype.itemsize               # out block
                 + 2 * (wq_m.size + wkv_m.size + wo_m.size) * itemsize
                 + 2 * (bq_m.size + bkv_m.size + bo_m.size) * 4
                 + S * 2 * E * itemsize                             # kv
                 + q_block * E * itemsize                           # q
                 + q_block * S * 4                                  # scores
                 + 2 * q_block * E * 4)                             # ctx / out f32
    vmem_limit = int(min(max(2 * vmem_need, 32 * 1024 * 1024),
                         100 * 1024 * 1024))

    out = pl.pallas_call(
        kernel,
        out_shape=jax.ShapeDtypeStruct((B, S, E), x.dtype),
        grid_spec=pltpu.PrefetchScalarGridSpec(
            num_scalar_prefetch=0,
            grid=(B, n_q),
            in_specs=[
                pl.BlockSpec((1, S, E), lambda b, i: (b, 0, 0)),   # x (full seq)
                pl.BlockSpec((E, E), lambda b, i: (0, 0)),         # Wq  (resident)
                pl.BlockSpec((1, E), lambda b, i: (0, 0)),         # bq
                pl.BlockSpec((E, 2 * E), lambda b, i: (0, 0)),     # Wkv (resident)
                pl.BlockSpec((1, 2 * E), lambda b, i: (0, 0)),     # bkv
                pl.BlockSpec((E, E), lambda b, i: (0, 0)),         # Wo  (resident)
                pl.BlockSpec((1, E), lambda b, i: (0, 0)),         # bo
            ],
            out_specs=pl.BlockSpec((1, q_block, E), lambda b, i: (b, i, 0)),
        ),
        compiler_params=pltpu.CompilerParams(
            dimension_semantics=("parallel", "parallel"),
            vmem_limit_bytes=vmem_limit),
        cost_estimate=pl.CostEstimate(flops=flops,
                                      transcendentals=transcendentals,
                                      bytes_accessed=bytes_accessed),
    )(x_c, wq_m, bq_m, wkv_m, bkv_m, wo_m, bo_m)
    return out


class MultiHeadAttentionPallas:
    """JAX/Pallas replica of the PyTorch MultiHeadAttention forward pass."""

    def __init__(self, input_size, num_heads, key, compute_dtype=jnp.float32):
        assert input_size % num_heads == 0
        self.input_size = input_size
        self.num_heads = num_heads
        self.head_dim = input_size // num_heads
        self.compute_dtype = compute_dtype

        keys = jax.random.split(key, 8)

        def linear_init(wkey, bkey):
            bound = 1.0 / math.sqrt(input_size)
            w = jax.random.uniform(wkey, (input_size, input_size),
                                   minval=-bound, maxval=bound, dtype=jnp.float32)
            b = jax.random.uniform(bkey, (input_size,),
                                   minval=-bound, maxval=bound, dtype=jnp.float32)
            return w, b

        self.wq, self.bq = linear_init(keys[0], keys[1])
        self.wk, self.bk = linear_init(keys[2], keys[3])
        self.wv, self.bv = linear_init(keys[4], keys[5])
        self.wo, self.bo = linear_init(keys[6], keys[7])

    def __call__(self, x, compute_dtype=None, q_block=None, approx_reciprocal=True):
        cdt = self.compute_dtype if compute_dtype is None else compute_dtype
        return mha_forward(x, self.wq, self.bq, self.wk, self.bk,
                           self.wv, self.bv, self.wo, self.bo,
                           num_heads=self.num_heads, compute_dtype=cdt,
                           q_block=q_block, approx_reciprocal=approx_reciprocal)


# ----------------------------------------------------------------------------
# Pure-JAX reference of the same forward pass (mirrors the torch code)
# ----------------------------------------------------------------------------
def mha_reference(x, m):
    B, S, E = x.shape
    H, D = m.num_heads, m.head_dim
    q = (x @ m.wq.T + m.bq).reshape(B, S, H, D).transpose(0, 2, 1, 3)
    k = (x @ m.wk.T + m.bk).reshape(B, S, H, D).transpose(0, 2, 1, 3)
    v = (x @ m.wv.T + m.bv).reshape(B, S, H, D).transpose(0, 2, 1, 3)
    att = jax.nn.softmax(
        jnp.einsum("bhqd,bhkd->bhqk", q, k) / jnp.sqrt(jnp.float32(D)), axis=-1)
    out = jnp.einsum("bhqk,bhkd->bhqd", att, v)
    out = out.transpose(0, 2, 1, 3).reshape(B, S, H * D)
    return out @ m.wo.T + m.bo


# ----------------------------------------------------------------------------
# Main: deterministic inputs, run, verify
# ----------------------------------------------------------------------------
if __name__ == "__main__":
    key = jax.random.PRNGKey(0)
    pkey, xkey, pkey2, xkey2 = jax.random.split(key, 4)

    # Small shapes consistent with the module: batch=2, seq=8, hidden=32, heads=4
    B, S, E, H = 2, 8, 32, 4
    module = MultiHeadAttentionPallas(input_size=E, num_heads=H, key=pkey)
    x = jax.random.normal(xkey, (B, S, E), jnp.float32)
    ref = mha_reference(x, module)

    # 1) Strict math check: f32 operands, exact reciprocal.
    out = jax.block_until_ready(module(x, approx_reciprocal=False))
    assert out.shape == (B, S, E), out.shape
    assert jnp.allclose(out, ref, atol=1e-4, rtol=1e-4), \
        float(jnp.max(jnp.abs(out - ref)))

    # 2) Default perf path: f32 operands, approx (EUP) reciprocal.
    out_fast = jax.block_until_ready(module(x))
    assert jnp.allclose(out_fast, ref, atol=2e-3, rtol=2e-3), \
        float(jnp.max(jnp.abs(out_fast - ref)))

    # 3) Lane/sublane-granular shapes + query tiling + bf16 MXU operands
    #    (f32 accumulation and f32 softmax/bias epilogue), looser tolerance.
    B2, S2, E2, H2 = 2, 128, 256, 4
    module2 = MultiHeadAttentionPallas(input_size=E2, num_heads=H2, key=pkey2)
    x2 = jax.random.normal(xkey2, (B2, S2, E2), jnp.float32)
    ref2 = mha_reference(x2, module2)
    out2 = jax.block_until_ready(
        module2(x2, compute_dtype=jnp.bfloat16, q_block=64))
    assert out2.shape == (B2, S2, E2), out2.shape
    assert jnp.allclose(out2, ref2, atol=5e-2, rtol=5e-2), \
        float(jnp.max(jnp.abs(out2 - ref2)))

    print("KERNEL_OK")
</pallas_src>

<mosaic_0001>
module attributes {stable_mosaic.version = 11 : i64} {
  func.func @_mha_kernel(%arg0: i32, %arg1: i32, %arg2: memref<1x8x32xf32, #tpu.memory_space<vmem>>, %arg3: memref<32x32xf32, #tpu.memory_space<vmem>>, %arg4: memref<1x32xf32, #tpu.memory_space<vmem>>, %arg5: memref<32x64xf32, #tpu.memory_space<vmem>>, %arg6: memref<1x64xf32, #tpu.memory_space<vmem>>, %arg7: memref<32x32xf32, #tpu.memory_space<vmem>>, %arg8: memref<1x32xf32, #tpu.memory_space<vmem>>, %arg9: memref<1x8x32xf32, #tpu.memory_space<vmem>>) attributes {dimension_semantics = [#tpu.dimension_semantics<parallel>, #tpu.dimension_semantics<parallel>], iteration_bounds = array<i64: 2, 1>, scalar_prefetch = 0 : i64, scratch_operands = 0 : i64, tpu.core_type = #tpu.core_type<tc>, window_params = [{transform_indices = @transform_0, window_bounds = array<i64: 1, 8, 32>}, {pipeline_mode = #tpu.pipeline_mode<synchronous>, transform_indices = @transform_1, window_bounds = array<i64: 32, 32>}, {pipeline_mode = #tpu.pipeline_mode<synchronous>, transform_indices = @transform_2, window_bounds = array<i64: 1, 32>}, {pipeline_mode = #tpu.pipeline_mode<synchronous>, transform_indices = @transform_3, window_bounds = array<i64: 32, 64>}, {pipeline_mode = #tpu.pipeline_mode<synchronous>, transform_indices = @transform_4, window_bounds = array<i64: 1, 64>}, {pipeline_mode = #tpu.pipeline_mode<synchronous>, transform_indices = @transform_5, window_bounds = array<i64: 32, 32>}, {pipeline_mode = #tpu.pipeline_mode<synchronous>, transform_indices = @transform_6, window_bounds = array<i64: 1, 32>}, {transform_indices = @transform_7, window_bounds = array<i64: 1, 8, 32>}]} {
    %c0 = arith.constant 0 : index
    %c0_0 = arith.constant 0 : index
    %c0_1 = arith.constant 0 : index
    %0 = vector.load %arg2[%c0, %c0_0, %c0_1] : memref<1x8x32xf32, #tpu.memory_space<vmem>>, vector<1x8x32xf32>
    %1 = vector.shape_cast %0 : vector<1x8x32xf32> to vector<8x32xf32>
    %c8_i32 = arith.constant 8 : i32
    %2 = arith.muli %arg1, %c8_i32 : i32
    %3 = tpu.assume_multiple %2, 8 : i32
    %c0_2 = arith.constant 0 : index
    %4 = arith.index_cast %3 : i32 to index
    %c0_3 = arith.constant 0 : index
    %5 = vector.load %arg2[%c0_2, %4, %c0_3] : memref<1x8x32xf32, #tpu.memory_space<vmem>>, vector<1x8x32xf32>
    %6 = vector.shape_cast %5 : vector<1x8x32xf32> to vector<8x32xf32>
    %c0_4 = arith.constant 0 : index
    %c0_5 = arith.constant 0 : index
    %7 = vector.load %arg5[%c0_4, %c0_5] : memref<32x64xf32, #tpu.memory_space<vmem>>, vector<32x64xf32>
    %cst = arith.constant dense<0.000000e+00> : vector<8x64xf32>
    %8 = tpu.matmul %1, %7, %cst {dimension_numbers = #tpu.dot_dimension_numbers<[1], [0], [0], [1], [0, 0, 1, 1], [], []>} : vector<8x32xf32>, vector<32x64xf32>, vector<8x64xf32> -> vector<8x64xf32>
    %c0_6 = arith.constant 0 : index
    %c0_7 = arith.constant 0 : index
    %9 = vector.load %arg6[%c0_6, %c0_7] : memref<1x64xf32, #tpu.memory_space<vmem>>, vector<1x64xf32>
    %10 = vector.broadcast %9 : vector<1x64xf32> to vector<8x64xf32>
    %11 = arith.addf %8, %10 : vector<8x64xf32>
    %c0_8 = arith.constant 0 : index
    %c0_9 = arith.constant 0 : index
    %12 = vector.load %arg3[%c0_8, %c0_9] : memref<32x32xf32, #tpu.memory_space<vmem>>, vector<32x32xf32>
    %cst_10 = arith.constant dense<0.000000e+00> : vector<8x32xf32>
    %13 = tpu.matmul %6, %12, %cst_10 {dimension_numbers = #tpu.dot_dimension_numbers<[1], [0], [0], [1], [0, 0, 1, 1], [], []>} : vector<8x32xf32>, vector<32x32xf32>, vector<8x32xf32> -> vector<8x32xf32>
    %c0_11 = arith.constant 0 : index
    %c0_12 = arith.constant 0 : index
    %14 = vector.load %arg4[%c0_11, %c0_12] : memref<1x32xf32, #tpu.memory_space<vmem>>, vector<1x32xf32>
    %15 = vector.broadcast %14 : vector<1x32xf32> to vector<8x32xf32>
    %16 = arith.addf %13, %15 : vector<8x32xf32>
    %17 = vector.extract_strided_slice %16 {offsets = [0, 0], sizes = [8, 8], strides = [1, 1]} : vector<8x32xf32> to vector<8x8xf32>
    %18 = vector.extract_strided_slice %11 {offsets = [0, 0], sizes = [8, 8], strides = [1, 1]} : vector<8x64xf32> to vector<8x8xf32>
    %19 = vector.extract_strided_slice %11 {offsets = [0, 32], sizes = [8, 8], strides = [1, 1]} : vector<8x64xf32> to vector<8x8xf32>
    %cst_13 = arith.constant dense<0.000000e+00> : vector<8x8xf32>
    %20 = tpu.matmul %17, %18, %cst_13 {dimension_numbers = #tpu.dot_dimension_numbers<[1], [1], [0], [0], [0, 0, 1, 0], [], []>} : vector<8x8xf32>, vector<8x8xf32>, vector<8x8xf32> -> vector<8x8xf32>
    %cst_14 = arith.constant dense<0xFF800000> : vector<8xf32>
    %21 = vector.multi_reduction <maximumf>, %20, %cst_14 [1] : vector<8x8xf32> to vector<8xf32>
    %22 = vector.shape_cast %21 : vector<8xf32> to vector<8x1xf32>
    %23 = vector.broadcast %22 : vector<8x1xf32> to vector<8x8xf32>
    %24 = arith.subf %20, %23 : vector<8x8xf32>
    %25 = math.exp %24 : vector<8x8xf32>
    %cst_15 = arith.constant dense<0.000000e+00> : vector<8xf32>
    %26 = vector.multi_reduction <add>, %25, %cst_15 [1] : vector<8x8xf32> to vector<8xf32>
    %27 = vector.shape_cast %26 : vector<8xf32> to vector<8x1xf32>
    %cst_16 = arith.constant dense<0.000000e+00> : vector<8x8xf32>
    %28 = tpu.matmul %25, %19, %cst_16 {dimension_numbers = #tpu.dot_dimension_numbers<[1], [0], [0], [1], [0, 0, 1, 1], [], []>} : vector<8x8xf32>, vector<8x8xf32>, vector<8x8xf32> -> vector<8x8xf32>
    %29 = tpu.reciprocal %27 : vector<8x1xf32> -> vector<8x1xf32>
    %30 = vector.broadcast %29 : vector<8x1xf32> to vector<8x8xf32>
    %31 = arith.mulf %28, %30 : vector<8x8xf32>
    %32 = vector.extract_strided_slice %16 {offsets = [0, 8], sizes = [8, 8], strides = [1, 1]} : vector<8x32xf32> to vector<8x8xf32>
    %33 = vector.extract_strided_slice %11 {offsets = [0, 8], sizes = [8, 8], strides = [1, 1]} : vector<8x64xf32> to vector<8x8xf32>
    %34 = vector.extract_strided_slice %11 {offsets = [0, 40], sizes = [8, 8], strides = [1, 1]} : vector<8x64xf32> to vector<8x8xf32>
    %cst_17 = arith.constant dense<0.000000e+00> : vector<8x8xf32>
    %35 = tpu.matmul %32, %33, %cst_17 {dimension_numbers = #tpu.dot_dimension_numbers<[1], [1], [0], [0], [0, 0, 1, 0], [], []>} : vector<8x8xf32>, vector<8x8xf32>, vector<8x8xf32> -> vector<8x8xf32>
    %cst_18 = arith.constant dense<0xFF800000> : vector<8xf32>
    %36 = vector.multi_reduction <maximumf>, %35, %cst_18 [1] : vector<8x8xf32> to vector<8xf32>
    %37 = vector.shape_cast %36 : vector<8xf32> to vector<8x1xf32>
    %38 = vector.broadcast %37 : vector<8x1xf32> to vector<8x8xf32>
    %39 = arith.subf %35, %38 : vector<8x8xf32>
    %40 = math.exp %39 : vector<8x8xf32>
    %cst_19 = arith.constant dense<0.000000e+00> : vector<8xf32>
    %41 = vector.multi_reduction <add>, %40, %cst_19 [1] : vector<8x8xf32> to vector<8xf32>
    %42 = vector.shape_cast %41 : vector<8xf32> to vector<8x1xf32>
    %cst_20 = arith.constant dense<0.000000e+00> : vector<8x8xf32>
    %43 = tpu.matmul %40, %34, %cst_20 {dimension_numbers = #tpu.dot_dimension_numbers<[1], [0], [0], [1], [0, 0, 1, 1], [], []>} : vector<8x8xf32>, vector<8x8xf32>, vector<8x8xf32> -> vector<8x8xf32>
    %44 = tpu.reciprocal %42 : vector<8x1xf32> -> vector<8x1xf32>
    %45 = vector.broadcast %44 : vector<8x1xf32> to vector<8x8xf32>
    %46 = arith.mulf %43, %45 : vector<8x8xf32>
    %47 = vector.extract_strided_slice %16 {offsets = [0, 16], sizes = [8, 8], strides = [1, 1]} : vector<8x32xf32> to vector<8x8xf32>
    %48 = vector.extract_strided_slice %11 {offsets = [0, 16], sizes = [8, 8], strides = [1, 1]} : vector<8x64xf32> to vector<8x8xf32>
    %49 = vector.extract_strided_slice %11 {offsets = [0, 48], sizes = [8, 8], strides = [1, 1]} : vector<8x64xf32> to vector<8x8xf32>
    %cst_21 = arith.constant dense<0.000000e+00> : vector<8x8xf32>
    %50 = tpu.matmul %47, %48, %cst_21 {dimension_numbers = #tpu.dot_dimension_numbers<[1], [1], [0], [0], [0, 0, 1, 0], [], []>} : vector<8x8xf32>, vector<8x8xf32>, vector<8x8xf32> -> vector<8x8xf32>
    %cst_22 = arith.constant dense<0xFF800000> : vector<8xf32>
    %51 = vector.multi_reduction <maximumf>, %50, %cst_22 [1] : vector<8x8xf32> to vector<8xf32>
    %52 = vector.shape_cast %51 : vector<8xf32> to vector<8x1xf32>
    %53 = vector.broadcast %52 : vector<8x1xf32> to vector<8x8xf32>
    %54 = arith.subf %50, %53 : vector<8x8xf32>
    %55 = math.exp %54 : vector<8x8xf32>
    %cst_23 = arith.constant dense<0.000000e+00> : vector<8xf32>
    %56 = vector.multi_reduction <add>, %55, %cst_23 [1] : vector<8x8xf32> to vector<8xf32>
    %57 = vector.shape_cast %56 : vector<8xf32> to vector<8x1xf32>
    %cst_24 = arith.constant dense<0.000000e+00> : vector<8x8xf32>
    %58 = tpu.matmul %55, %49, %cst_24 {dimension_numbers = #tpu.dot_dimension_numbers<[1], [0], [0], [1], [0, 0, 1, 1], [], []>} : vector<8x8xf32>, vector<8x8xf32>, vector<8x8xf32> -> vector<8x8xf32>
    %59 = tpu.reciprocal %57 : vector<8x1xf32> -> vector<8x1xf32>
    %60 = vector.broadcast %59 : vector<8x1xf32> to vector<8x8xf32>
    %61 = arith.mulf %58, %60 : vector<8x8xf32>
    %62 = vector.extract_strided_slice %16 {offsets = [0, 24], sizes = [8, 8], strides = [1, 1]} : vector<8x32xf32> to vector<8x8xf32>
    %63 = vector.extract_strided_slice %11 {offsets = [0, 24], sizes = [8, 8], strides = [1, 1]} : vector<8x64xf32> to vector<8x8xf32>
    %64 = vector.extract_strided_slice %11 {offsets = [0, 56], sizes = [8, 8], strides = [1, 1]} : vector<8x64xf32> to vector<8x8xf32>
    %cst_25 = arith.constant dense<0.000000e+00> : vector<8x8xf32>
    %65 = tpu.matmul %62, %63, %cst_25 {dimension_numbers = #tpu.dot_dimension_numbers<[1], [1], [0], [0], [0, 0, 1, 0], [], []>} : vector<8x8xf32>, vector<8x8xf32>, vector<8x8xf32> -> vector<8x8xf32>
    %cst_26 = arith.constant dense<0xFF800000> : vector<8xf32>
    %66 = vector.multi_reduction <maximumf>, %65, %cst_26 [1] : vector<8x8xf32> to vector<8xf32>
    %67 = vector.shape_cast %66 : vector<8xf32> to vector<8x1xf32>
    %68 = vector.broadcast %67 : vector<8x1xf32> to vector<8x8xf32>
    %69 = arith.subf %65, %68 : vector<8x8xf32>
    %70 = math.exp %69 : vector<8x8xf32>
    %cst_27 = arith.constant dense<0.000000e+00> : vector<8xf32>
    %71 = vector.multi_reduction <add>, %70, %cst_27 [1] : vector<8x8xf32> to vector<8xf32>
    %72 = vector.shape_cast %71 : vector<8xf32> to vector<8x1xf32>
    %cst_28 = arith.constant dense<0.000000e+00> : vector<8x8xf32>
    %73 = tpu.matmul %70, %64, %cst_28 {dimension_numbers = #tpu.dot_dimension_numbers<[1], [0], [0], [1], [0, 0, 1, 1], [], []>} : vector<8x8xf32>, vector<8x8xf32>, vector<8x8xf32> -> vector<8x8xf32>
    %74 = tpu.reciprocal %72 : vector<8x1xf32> -> vector<8x1xf32>
    %75 = vector.broadcast %74 : vector<8x1xf32> to vector<8x8xf32>
    %76 = arith.mulf %73, %75 : vector<8x8xf32>
    %77 = tpu.concatenate %31, %46, %61, %76 in 1 : vector<8x8xf32>, vector<8x8xf32>, vector<8x8xf32>, vector<8x8xf32> -> vector<8x32xf32>
    %c0_29 = arith.constant 0 : index
    %c0_30 = arith.constant 0 : index
    %78 = vector.load %arg7[%c0_29, %c0_30] : memref<32x32xf32, #tpu.memory_space<vmem>>, vector<32x32xf32>
    %cst_31 = arith.constant dense<0.000000e+00> : vector<8x32xf32>
    %79 = tpu.matmul %77, %78, %cst_31 {dimension_numbers = #tpu.dot_dimension_numbers<[1], [0], [0], [1], [0, 0, 1, 1], [], []>} : vector<8x32xf32>, vector<32x32xf32>, vector<8x32xf32> -> vector<8x32xf32>
    %c0_32 = arith.constant 0 : index
    %c0_33 = arith.constant 0 : index
    %80 = vector.load %arg8[%c0_32, %c0_33] : memref<1x32xf32, #tpu.memory_space<vmem>>, vector<1x32xf32>
    %81 = vector.broadcast %80 : vector<1x32xf32> to vector<8x32xf32>
    %82 = arith.addf %79, %81 : vector<8x32xf32>
    %c0_34 = arith.constant 0 : index
    %c0_35 = arith.constant 0 : index
    %c0_36 = arith.constant 0 : index
    %83 = vector.load %arg9[%c0_34, %c0_35, %c0_36] : memref<1x8x32xf32, #tpu.memory_space<vmem>>, vector<1x8x32xf32>
    %84 = vector.shape_cast %83 : vector<1x8x32xf32> to vector<8x32xf32>
    %85 = vector.shape_cast %82 : vector<8x32xf32> to vector<1x8x32xf32>
    tpu.vector_store %arg9[%c0_34, %c0_35, %c0_36], %85 {strides = array<i32>} : memref<1x8x32xf32, #tpu.memory_space<vmem>>, vector<1x8x32xf32>,
    return
  }
  func.func @transform_0(%arg0: i32, %arg1: i32) -> (i32, i32, i32) {
    %c0_i32 = arith.constant 0 : i32
    %c0_i32_0 = arith.constant 0 : i32
    %c0_i32_1 = arith.constant 0 : i32
    return %arg0, %c0_i32, %c0_i32_0 : i32, i32, i32
  }
  func.func @transform_1(%arg0: i32, %arg1: i32) -> (i32, i32) {
    %c0_i32 = arith.constant 0 : i32
    %c0_i32_0 = arith.constant 0 : i32
    %c0_i32_1 = arith.constant 0 : i32
    return %c0_i32, %c0_i32_0 : i32, i32
  }
  func.func @transform_2(%arg0: i32, %arg1: i32) -> (i32, i32) {
    %c0_i32 = arith.constant 0 : i32
    %c0_i32_0 = arith.constant 0 : i32
    %c0_i32_1 = arith.constant 0 : i32
    return %c0_i32, %c0_i32_0 : i32, i32
  }
  func.func @transform_3(%arg0: i32, %arg1: i32) -> (i32, i32) {
    %c0_i32 = arith.constant 0 : i32
    %c0_i32_0 = arith.constant 0 : i32
    %c0_i32_1 = arith.constant 0 : i32
    return %c0_i32, %c0_i32_0 : i32, i32
  }
  func.func @transform_4(%arg0: i32, %arg1: i32) -> (i32, i32) {
    %c0_i32 = arith.constant 0 : i32
    %c0_i32_0 = arith.constant 0 : i32
    %c0_i32_1 = arith.constant 0 : i32
    return %c0_i32, %c0_i32_0 : i32, i32
  }
  func.func @transform_5(%arg0: i32, %arg1: i32) -> (i32, i32) {
    %c0_i32 = arith.constant 0 : i32
    %c0_i32_0 = arith.constant 0 : i32
    %c0_i32_1 = arith.constant 0 : i32
    return %c0_i32, %c0_i32_0 : i32, i32
  }
  func.func @transform_6(%arg0: i32, %arg1: i32) -> (i32, i32) {
    %c0_i32 = arith.constant 0 : i32
    %c0_i32_0 = arith.constant 0 : i32
    %c0_i32_1 = arith.constant 0 : i32
    return %c0_i32, %c0_i32_0 : i32, i32
  }
  func.func @transform_7(%arg0: i32, %arg1: i32) -> (i32, i32, i32) {
    %c0_i32 = arith.constant 0 : i32
    %c0_i32_0 = arith.constant 0 : i32
    return %arg0, %arg1, %c0_i32 : i32, i32, i32
  }
}

</mosaic_0001>

<llo_original>
// kernel: tpu_custom_call.1
$region0: #{tpu_custom_call.1}
  #allocation0 [shape = 'u32[]', space=smem, size = 0x4, offset = 0x4, fixed_abs, tag = 'smem constant byte address 0x4 - core index']
  #allocation1 [shape = 'u32[72,128]{1,0:T(1,128)}', space=vmem, size = 0x9000, scoped, tag = 'internal scratch']
  %s0 = inlined_call_operand.hbm [shape: f32[2,8,32], index: 0, kind: input, shape index: {}]
  %s1 = inlined_call_operand.hbm [shape: f32[32,32], index: 1, kind: input, shape index: {}]
  %s2 = inlined_call_operand.vmem [shape: f32[1,32], index: 2, kind: input, shape index: {}]
  %s3 = inlined_call_operand.hbm [shape: f32[32,64], index: 3, kind: input, shape index: {}]
  %s4 = inlined_call_operand.vmem [shape: f32[1,64], index: 4, kind: input, shape index: {}]
  %s5 = inlined_call_operand.hbm [shape: f32[32,32], index: 5, kind: input, shape index: {}]
  %s6 = inlined_call_operand.vmem [shape: f32[1,32], index: 6, kind: input, shape index: {}]
  %s7 = inlined_call_operand.hbm [shape: f32[2,8,32], index: 7, kind: output, shape index: {}]
  %s8 = sld [smem:[#allocation0]]
  $region77: #{tpu_custom_call.1} parent=0
    _
  %s10 = ssub.s32 1, %s8
  %s11 = scalar_select 0, %s10, %s8
  $region1: #{tpu_custom_call.1} parent=0
    #allocation2 [shape = 'u8[8192]{0}', space=vmem, size = 0x2000, scoped, tag = 'input window, operand 0']
    #allocation3 [shape = 's32[2]{0}', space=sflag, size = 0x8, scoped, tag = 'scoped memory for tpu_custom_call.1']
    #allocation4 [shape = 's32[2]{0}', space=sflag, size = 0x8, scoped, tag = 'scoped memory for tpu_custom_call.1']
    #allocation5 [shape = 'u8[16384]{0}', space=vmem, size = 0x4000, scoped, tag = 'input window, operand 1, single buffered']
    #allocation6 [shape = 's32[1]{0}', space=sflag, size = 0x4, scoped, tag = 'scoped memory for tpu_custom_call.1']
    #allocation7 [shape = 'u8[16384]{0}', space=vmem, size = 0x4000, scoped, tag = 'input window, operand 3, single buffered']
    #allocation8 [shape = 'u8[16384]{0}', space=vmem, size = 0x4000, scoped, tag = 'input window, operand 5, single buffered']
    #allocation9 [shape = 's32[1]{0}', space=sflag, size = 0x4, scoped, tag = 'scoped memory for tpu_custom_call.1']
    #allocation10 [shape = 'u8[8192]{0}', space=vmem, size = 0x2000, scoped, tag = 'output window, operand 0']
    %12 = vsyncpa [#allocation3], 0
    %s13 = scalar_lea.sflag [#allocation3], 1
    %14 = vsyncpa %s13, 0
    %15 = vsyncpa [#allocation6], 0
    %16 = vsyncpa [#allocation9], 0
    %17 = vsyncpa [#allocation4], 0
    %s18 = scalar_lea.sflag [#allocation4], 1
    %19 = vsyncpa %s18, 0
    loop: start=0, step=1, limit=4
    $region2: #{tpu_custom_call.1} parent=1 // loop_pre_header
      _
    $region3: #{tpu_custom_call.1} parent=1 // loop_header
      %s21 = sphi 0, %s25
      %p22 = scmp.ge.s32.totalorder %s21, 4
      %s28 = sphi 0, %s40
      %s29 = sphi 0, %s36
      %s30 = sphi 0, %s28
      %s31 = sphi 0, %s29
      %s32 = sphi 0, %s30
      %s33 = sphi 0, %s31
      %s43 = sphi 0, %s45
      %s46 = sphi 0, %s43
      %s47 = sphi 0, %s46
      %s63 = sphi 0, %s47
      %s67 = sphi 0, %s67
      %s69 = sphi 0, %s67
      %s70 = sphi 0, %s69
      %s84 = sphi 0, %s70
      %s88 = sphi 0, %s88
      %s90 = sphi 0, %s88
      %s91 = sphi 0, %s90
      %s105 = sphi 0, %s91
      %s109 = sphi 0, %s109
      %s111 = sphi 0, %s109
      %s112 = sphi 0, %s111
      %s126 = sphi 0, %s112
      %s130 = sphi 0, %s130
      %s132 = sphi 0, %s130
      %s133 = sphi 0, %s132
      %s147 = sphi 0, %s133
      %s151 = sphi 0, %s151
      %s153 = sphi 0, %s151
      %s154 = sphi 0, %s153
      %s168 = sphi 0, %s154
      %s172 = sphi 0, %s172
      %s174 = sphi 0, %s172
      %s175 = sphi 0, %s174
      %s189 = sphi 0, %s175
      %s197 = sphi 0, %s199
      %s200 = sphi 0, %s197
      %s201 = sphi 0, %s200
      %s217 = sphi 0, %s201
    $region4: #{tpu_custom_call.1} parent=1 // loop_header_branch
      %24 = sbr.rel (%p22) target = $region8
    $region5: #{tpu_custom_call.1} parent=1 // loop_body
      %s26 = ssub.s32 %s21, 1
      %s27 = ssub.s32 %s21, 2
      %s34 = sadd.s32 1, %s29
      %p35 = scmp.ge.s32.totalorder %s34, 1
      %s36 = scalar_select %p35, 0, %s34
      %s37 = sadd.s32 1, %s28
      %s38 = scalar_select %p35, %s37, %s28
      %p39 = scmp.ge.s32.totalorder %s38, 2
      %s40 = scalar_select %p39, 0, %s38
      %s41 = ssub.s32 %s28, %s40
      %p42 = scmp.eq.s32.totalorder %s41, 0
      %s44 = sadd.s32 %s43, 1
      %s45 = scalar_select %p42, %s43, %s44
      %p48 = pneg %p42
      %p49 = scmp.eq.s32.totalorder %s21, 1
      %p50 = por %p48, %p49
      %p51 = scmp.ne.s32.totalorder %s43, %s46
      %p52 = scmp.eq.s32.totalorder %s21, 0
      %p53 = por %p51, %p52
      %p54 = scmp.ne.s32.totalorder %s43, %s46
      %p55 = scmp.eq.s32.totalorder %s26, 1
      %p56 = por %p54, %p55
      %p57 = scmp.ne.s32.totalorder %s46, %s47
      %p58 = scmp.eq.s32.totalorder %s26, 0
      %p59 = por %p57, %p58
      %p60 = scmp.ne.s32.totalorder %s46, %s47
      %p61 = scmp.eq.s32.totalorder %s27, 1
      %p62 = por %p60, %p61
      %p64 = scmp.ne.s32.totalorder %s47, %s63
      %p65 = scmp.eq.s32.totalorder %s27, 0
      %p66 = por %p64, %p65
      %s68 = sadd.s32 %s67, 1
      %p71 = scmp.eq.s32.totalorder %s21, 1
      %p72 = scmp.ne.s32.totalorder %s67, %s69
      %p73 = scmp.eq.s32.totalorder %s21, 0
      %p74 = por %p72, %p73
      %p75 = scmp.ne.s32.totalorder %s67, %s69
      %p76 = scmp.eq.s32.totalorder %s26, 1
      %p77 = por %p75, %p76
      %p78 = scmp.ne.s32.totalorder %s69, %s70
      %p79 = scmp.eq.s32.totalorder %s26, 0
      %p80 = por %p78, %p79
      %p81 = scmp.ne.s32.totalorder %s69, %s70
      %p82 = scmp.eq.s32.totalorder %s27, 1
      %p83 = por %p81, %p82
      %p85 = scmp.ne.s32.totalorder %s70, %s84
      %p86 = scmp.eq.s32.totalorder %s27, 0
      %p87 = por %p85, %p86
      %s89 = sadd.s32 %s88, 1
      %p92 = scmp.eq.s32.totalorder %s21, 1
      %p93 = scmp.ne.s32.totalorder %s88, %s90
      %p94 = scmp.eq.s32.totalorder %s21, 0
      %p95 = por %p93, %p94
      %p96 = scmp.ne.s32.totalorder %s88, %s90
      %p97 = scmp.eq.s32.totalorder %s26, 1
      %p98 = por %p96, %p97
      %p99 = scmp.ne.s32.totalorder %s90, %s91
      %p100 = scmp.eq.s32.totalorder %s26, 0
      %p101 = por %p99, %p100
      %p102 = scmp.ne.s32.totalorder %s90, %s91
      %p103 = scmp.eq.s32.totalorder %s27, 1
      %p104 = por %p102, %p103
      %p106 = scmp.ne.s32.totalorder %s91, %s105
      %p107 = scmp.eq.s32.totalorder %s27, 0
      %p108 = por %p106, %p107
      %s110 = sadd.s32 %s109, 1
      %p113 = scmp.eq.s32.totalorder %s21, 1
      %p114 = scmp.ne.s32.totalorder %s109, %s111
      %p115 = scmp.eq.s32.totalorder %s21, 0
      %p116 = por %p114, %p115
      %p117 = scmp.ne.s32.totalorder %s109, %s111
      %p118 = scmp.eq.s32.totalorder %s26, 1
      %p119 = por %p117, %p118
      %p120 = scmp.ne.s32.totalorder %s111, %s112
      %p121 = scmp.eq.s32.totalorder %s26, 0
      %p122 = por %p120, %p121
      %p123 = scmp.ne.s32.totalorder %s111, %s112
      %p124 = scmp.eq.s32.totalorder %s27, 1
      %p125 = por %p123, %p124
      %p127 = scmp.ne.s32.totalorder %s112, %s126
      %p128 = scmp.eq.s32.totalorder %s27, 0
      %p129 = por %p127, %p128
      %s131 = sadd.s32 %s130, 1
      %p134 = scmp.eq.s32.totalorder %s21, 1
      %p135 = scmp.ne.s32.totalorder %s130, %s132
      %p136 = scmp.eq.s32.totalorder %s21, 0
      %p137 = por %p135, %p136
      %p138 = scmp.ne.s32.totalorder %s130, %s132
      %p139 = scmp.eq.s32.totalorder %s26, 1
      %p140 = por %p138, %p139
      %p141 = scmp.ne.s32.totalorder %s132, %s133
      %p142 = scmp.eq.s32.totalorder %s26, 0
      %p143 = por %p141, %p142
      %p144 = scmp.ne.s32.totalorder %s132, %s133
      %p145 = scmp.eq.s32.totalorder %s27, 1
      %p146 = por %p144, %p145
      %p148 = scmp.ne.s32.totalorder %s133, %s147
      %p149 = scmp.eq.s32.totalorder %s27, 0
      %p150 = por %p148, %p149
      %s152 = sadd.s32 %s151, 1
      %p155 = scmp.eq.s32.totalorder %s21, 1
      %p156 = scmp.ne.s32.totalorder %s151, %s153
      %p157 = scmp.eq.s32.totalorder %s21, 0
      %p158 = por %p156, %p157
      %p159 = scmp.ne.s32.totalorder %s151, %s153
      %p160 = scmp.eq.s32.totalorder %s26, 1
      %p161 = por %p159, %p160
      %p162 = scmp.ne.s32.totalorder %s153, %s154
      %p163 = scmp.eq.s32.totalorder %s26, 0
      %p164 = por %p162, %p163
      %p165 = scmp.ne.s32.totalorder %s153, %s154
      %p166 = scmp.eq.s32.totalorder %s27, 1
      %p167 = por %p165, %p166
      %p169 = scmp.ne.s32.totalorder %s154, %s168
      %p170 = scmp.eq.s32.totalorder %s27, 0
      %p171 = por %p169, %p170
      %s173 = sadd.s32 %s172, 1
      %p176 = scmp.eq.s32.totalorder %s21, 1
      %p177 = scmp.ne.s32.totalorder %s172, %s174
      %p178 = scmp.eq.s32.totalorder %s21, 0
      %p179 = por %p177, %p178
      %p180 = scmp.ne.s32.totalorder %s172, %s174
      %p181 = scmp.eq.s32.totalorder %s26, 1
      %p182 = por %p180, %p181
      %p183 = scmp.ne.s32.totalorder %s174, %s175
      %p184 = scmp.eq.s32.totalorder %s26, 0
      %p185 = por %p183, %p184
      %p186 = scmp.ne.s32.totalorder %s174, %s175
      %p187 = scmp.eq.s32.totalorder %s27, 1
      %p188 = por %p186, %p187
      %p190 = scmp.ne.s32.totalorder %s175, %s189
      %p191 = scmp.eq.s32.totalorder %s27, 0
      %p192 = por %p190, %p191
      %s193 = ssub.s32 %s28, %s40
      %s194 = ssub.s32 %s29, %s36
      %s195 = sor.u32 %s193, %s194
      %p196 = scmp.eq.s32.totalorder %s195, 0
      %s198 = sadd.s32 %s197, 1
      %s199 = scalar_select %p196, %s197, %s198
      %p202 = pneg %p196
      %p203 = scmp.eq.s32.totalorder %s21, 1
      %p204 = por %p202, %p203
      %p205 = scmp.ne.s32.totalorder %s197, %s200
      %p206 = scmp.eq.s32.totalorder %s21, 0
      %p207 = por %p205, %p206
      %p208 = scmp.ne.s32.totalorder %s197, %s200
      %p209 = scmp.eq.s32.totalorder %s26, 1
      %p210 = por %p208, %p209
      %p211 = scmp.ne.s32.totalorder %s200, %s201
      %p212 = scmp.eq.s32.totalorder %s26, 0
      %p213 = por %p211, %p212
      %p214 = scmp.ne.s32.totalorder %s200, %s201
      %p215 = scmp.eq.s32.totalorder %s27, 1
      %p216 = por %p214, %p215
      %p218 = scmp.ne.s32.totalorder %s201, %s217
      %p219 = scmp.eq.s32.totalorder %s27, 0
      %p220 = por %p218, %p219
      %p221 = scmp.le.s32.totalorder 1, %s21
      %p222 = scmp.lt.s32.totalorder %s21, 3
      %p223 = pnand %p221, %p222
      %p224 = pneg %p223
      // Predicated region
      $region9: #{tpu_custom_call.1} parent=5 // pred_check
        _
      $region10: #{tpu_custom_call.1} parent=5 // pred_check_branch
        %226 = sbr.rel (%p223) target = $region12
      $region11: #{tpu_custom_call.1} parent=5 // pred_region
        %s227 = ssub.s32 %s21, 1
        // Predicated region
        $region13: #{tpu_custom_call.1} parent=11 // pred_check
          %p228 = pneg %p80
        $region14: #{tpu_custom_call.1} parent=11 // pred_check_branch
          %230 = sbr.rel (%p228) target = $region16
        $region15: #{tpu_custom_call.1} parent=11 // pred_region
          %232 = vsyncadd [#allocation6], 0
          %s233 = sshll.u32 %s1, 4
          %s234 = int_to_ptr.hbm [resolvable:$true] %s233
          %s235 = sshll.u32 [#allocation5], 4
          %s236 = int_to_ptr.vmem [resolvable:$true] %s235
          %241 = dma.hbm_to_vmem [thread:$0]  %s234, 512, %s236, [#allocation6], 128, 128, 8
        $region16: #{tpu_custom_call.1} parent=11 // pred_fallthru
          _
        // Predicated region
        $region17: #{tpu_custom_call.1} parent=11 // pred_check
          %p242 = pneg %p101
        $region18: #{tpu_custom_call.1} parent=11 // pred_check_branch
          %244 = sbr.rel (%p242) target = $region20
        $region19: #{tpu_custom_call.1} parent=11 // pred_region
          _
        $region20: #{tpu_custom_call.1} parent=11 // pred_fallthru
          _
        // Predicated region
        $region21: #{tpu_custom_call.1} parent=11 // pred_check
          %p245 = pneg %p122
        $region22: #{tpu_custom_call.1} parent=11 // pred_check_branch
          %247 = sbr.rel (%p245) target = $region24
        $region23: #{tpu_custom_call.1} parent=11 // pred_region
          %249 = vsyncadd [#allocation6], 0
          %s250 = sshll.u32 %s3, 4
          %s251 = int_to_ptr.hbm [resolvable:$true] %s250
          %s252 = sshll.u32 [#allocation7], 4
          %s253 = int_to_ptr.vmem [resolvable:$true] %s252
          %258 = dma.hbm_to_vmem [thread:$0]  %s251, 512, %s253, [#allocation6], 128, 128, 8
        $region24: #{tpu_custom_call.1} parent=11 // pred_fallthru
          _
        // Predicated region
        $region25: #{tpu_custom_call.1} parent=11 // pred_check
          %p259 = pneg %p143
        $region26: #{tpu_custom_call.1} parent=11 // pred_check_branch
          %261 = sbr.rel (%p259) target = $region28
        $region27: #{tpu_custom_call.1} parent=11 // pred_region
          _
        $region28: #{tpu_custom_call.1} parent=11 // pred_fallthru
          _
        // Predicated region
        $region29: #{tpu_custom_call.1} parent=11 // pred_check
          %p262 = pneg %p164
        $region30: #{tpu_custom_call.1} parent=11 // pred_check_branch
          %264 = sbr.rel (%p262) target = $region32
        $region31: #{tpu_custom_call.1} parent=11 // pred_region
          %266 = vsyncadd [#allocation9], 0
          %s267 = sshll.u32 %s5, 4
          %s268 = int_to_ptr.hbm [resolvable:$true] %s267
          %s269 = sshll.u32 [#allocation8], 4
          %s270 = int_to_ptr.vmem [resolvable:$true] %s269
          %275 = dma.hbm_to_vmem [thread:$0]  %s268, 512, %s270, [#allocation9], 128, 128, 8
        $region32: #{tpu_custom_call.1} parent=11 // pred_fallthru
          _
        // Predicated region
        $region33: #{tpu_custom_call.1} parent=11 // pred_check
          %p276 = pneg %p185
        $region34: #{tpu_custom_call.1} parent=11 // pred_check_branch
          %278 = sbr.rel (%p276) target = $region36
        $region35: #{tpu_custom_call.1} parent=11 // pred_region
          _
        $region36: #{tpu_custom_call.1} parent=11 // pred_fallthru
          _
      $region12: #{tpu_custom_call.1} parent=5 // pred_fallthru
        _
      %p279 = scmp.lt.s32.totalorder %s21, 2
      // Predicated region
      $region37: #{tpu_custom_call.1} parent=5 // pred_check
        %p280 = pneg %p279
      $region38: #{tpu_custom_call.1} parent=5 // pred_check_branch
        %282 = sbr.rel (%p280) target = $region40
      $region39: #{tpu_custom_call.1} parent=5 // pred_region
        // Predicated region
        $region41: #{tpu_custom_call.1} parent=39 // pred_check
          %p283 = pneg %p53
        $region42: #{tpu_custom_call.1} parent=39 // pred_check_branch
          %285 = sbr.rel (%p283) target = $region44
        $region43: #{tpu_custom_call.1} parent=39 // pred_region
          %s286 = sand.u32 %s43, 1
          %s287 = scalar_lea.sflag [#allocation3], %s286
          %s288 = sand.u32 %s43, 1
          %s289 = smul.addr %s288, 8
          %s290 = scalar_lea.vmem [#allocation2], %s289
          %292 = vsyncadd %s287, 0
          %s293 = smul.addr %s28, 8
          %s294 = scalar_lea.hbm %s0, %s293
          %s296 = sshll.u32 %s294, 4
          %s297 = int_to_ptr.hbm [resolvable:$true] %s296
          %s298 = sshll.u32 %s290, 4
          %s299 = int_to_ptr.vmem [resolvable:$true] %s298
          %301 = dma.hbm_to_vmem [thread:$0]  %s297, 128, %s299, %s287
        $region44: #{tpu_custom_call.1} parent=39 // pred_fallthru
          _
      $region40: #{tpu_custom_call.1} parent=5 // pred_fallthru
        _
      %p302 = scmp.le.s32.totalorder 1, %s21
      %p303 = scmp.lt.s32.totalorder %s21, 3
      %p304 = pnand %p302, %p303
      %p305 = pneg %p304
      // Predicated region
      $region45: #{tpu_custom_call.1} parent=5 // pred_check
        _
      $region46: #{tpu_custom_call.1} parent=5 // pred_check_branch
        %307 = sbr.rel (%p304) target = $region48
      $region47: #{tpu_custom_call.1} parent=5 // pred_region
        %s308 = ssub.s32 %s21, 1
        %s309 = sand.u32 %s46, 1
        %s310 = scalar_lea.sflag [#allocation3], %s309
        %s311 = sand.u32 %s46, 1
        %s312 = smul.addr %s311, 8
        %s313 = scalar_lea.vmem [#allocation2], %s312
        // Predicated region
        $region49: #{tpu_custom_call.1} parent=47 // pred_check
          %p314 = pneg %p59
        $region50: #{tpu_custom_call.1} parent=47 // pred_check_branch
          %316 = sbr.rel (%p314) target = $region52
        $region51: #{tpu_custom_call.1} parent=47 // pred_region
          %318 = dma.done %s310, 128
        $region52: #{tpu_custom_call.1} parent=47 // pred_fallthru
          _
        // Predicated region
        $region53: #{tpu_custom_call.1} parent=47 // pred_check
          %p319 = pneg %p80
        $region54: #{tpu_custom_call.1} parent=47 // pred_check_branch
          %321 = sbr.rel (%p319) target = $region56
        $region55: #{tpu_custom_call.1} parent=47 // pred_region
          %323 = dma.done [#allocation6], 512
        $region56: #{tpu_custom_call.1} parent=47 // pred_fallthru
          _
        // Predicated region
        $region57: #{tpu_custom_call.1} parent=47 // pred_check
          %p324 = pneg %p122
        $region58: #{tpu_custom_call.1} parent=47 // pred_check_branch
          %326 = sbr.rel (%p324) target = $region60
        $region59: #{tpu_custom_call.1} parent=47 // pred_region
          %328 = dma.done [#allocation6], 512
        $region60: #{tpu_custom_call.1} parent=47 // pred_fallthru
          _
        // Predicated region
        $region61: #{tpu_custom_call.1} parent=47 // pred_check
          %p329 = pneg %p164
        $region62: #{tpu_custom_call.1} parent=47 // pred_check_branch
          %331 = sbr.rel (%p329) target = $region64
        $region63: #{tpu_custom_call.1} parent=47 // pred_region
          %333 = dma.done [#allocation9], 512
        $region64: #{tpu_custom_call.1} parent=47 // pred_fallthru
          _
        %s334 = sand.u32 %s46, 1
        %s335 = scalar_lea.sflag [#allocation3], %s334
        %s336 = sand.u32 %s46, 1
        %s337 = smul.addr %s336, 8
        %s338 = scalar_lea.vmem [#allocation2], %s337
        %p339 = pneg %p59
        %p340 = pneg %p56
        %p341 = pneg %p80
        %p342 = pneg %p77
        %p343 = pneg %p101
        %p344 = pneg %p98
        %p345 = pneg %p122
        %p346 = pneg %p119
        %p347 = pneg %p143
        %p348 = pneg %p140
        %p349 = pneg %p164
        %p350 = pneg %p161
        %p351 = pneg %p185
        %p352 = pneg %p182
        %p353 = pneg %p213
        %p354 = pneg %p210
        %s355 = sand.u32 %s200, 1
        %s356 = scalar_lea.sflag [#allocation4], %s355
        %s357 = sand.u32 %s200, 1
        %s358 = smul.addr %s357, 8
        %s359 = scalar_lea.vmem [#allocation10], %s358
        %v360 = vld [vmem:[%s313] sm:$0xff]
        %s361 = smul.u32 %s31, 8
        %s362 = scalar_lea.vmem %s313, %s361 [#allocation2]
        %v363 = vld [vmem:[%s362] sm:$0xff]
        %v364 = vld [vmem:[#allocation7] sm:$0xff]
        %v365 = vld [vmem:[#allocation7 + $0x8] sm:$0xff]
        %v366 = vld [vmem:[#allocation7 + $0x10] sm:$0xff]
        %v367 = vld [vmem:[#allocation7 + $0x18] sm:$0xff]
        %v368 = vld [vmem:[%s4] sm:$0x1]
        %v370 = vperm.slane %v368, 0
        %vm372 = vcmask 261120
        %v374 = vsel %vm372, %v360, 0
        %376 = vmatpush.msra.mxu0 0.0
        %377 = vmatpush.msra.mxu0 0.0
        %378 = vmatpush.msra.mxu0 0.0
        %379 = vmatpush.msra.mxu0 0.0
        %380 = vmatpush.msra.mxu0 0.0
        %381 = vmatpush.msra.mxu0 0.0
        %382 = vmatpush.msra.mxu0 0.0
        %383 = vmatpush.msra.mxu0 0.0
        %384 = vmatpush.msra.mxu0 0.0
        %385 = vmatpush.msra.mxu0 0.0
        %386 = vmatpush.msra.mxu0 0.0
        %387 = vmatpush.msra.mxu0 0.0
        %388 = vmatpush.msra.mxu0 %v367
        %389 = vmatpush.msra.mxu0 %v366
        %390 = vmatpush.msra.mxu0 %v365
        %391 = vmatpush.msra.mxu0 %v364
        %392 = vmatmul.f32.gmra.mxu0 %v374
        %v393 = vpop.f32.mrf.mxu0
        %v394 = vadd.f32 %v370, %v393
        %395 = vdwg.mxu0
        %v396 = vld [vmem:[#allocation5] sm:$0xff]
        %v397 = vld [vmem:[#allocation5 + $0x8] sm:$0xff]
        %v398 = vld [vmem:[#allocation5 + $0x10] sm:$0xff]
        %v399 = vld [vmem:[#allocation5 + $0x18] sm:$0xff]
        %v400 = vld [vmem:[%s2] sm:$0x1]
        %v402 = vperm.slane %v400, 0
        %v405 = vsel %vm372, %v363, 0
        %407 = vmatpush.msra.mxu0 0.0
        %408 = vmatpush.msra.mxu0 0.0
        %409 = vmatpush.msra.mxu0 0.0
        %410 = vmatpush.msra.mxu0 0.0
        %411 = vmatpush.msra.mxu0 0.0
        %412 = vmatpush.msra.mxu0 0.0
        %413 = vmatpush.msra.mxu0 0.0
        %414 = vmatpush.msra.mxu0 0.0
        %415 = vmatpush.msra.mxu0 0.0
        %416 = vmatpush.msra.mxu0 0.0
        %417 = vmatpush.msra.mxu0 0.0
        %418 = vmatpush.msra.mxu0 0.0
        %419 = vmatpush.msra.mxu0 %v399
        %420 = vmatpush.msra.mxu0 %v398
        %421 = vmatpush.msra.mxu0 %v397
        %422 = vmatpush.msra.mxu0 %v396
        %423 = vmatmul.f32.gmra.mxu0 %v405
        %v424 = vpop.f32.mrf.mxu0
        %v425 = vadd.f32 %v402, %v424
        %426 = vdwg.mxu0
        %vm427 = vcmask 64512
        %v429 = vsel %vm427, %v425, 0
        %v432 = vsel %vm427, %v394, 0
        %434 = vmatpush.xpose.msra.mxu0 0.0
        %435 = vmatpush.xpose.msra.mxu0 0.0
        %436 = vmatpush.xpose.msra.mxu0 0.0
        %437 = vmatpush.xpose.msra.mxu0 0.0
        %438 = vmatpush.xpose.msra.mxu0 0.0
        %439 = vmatpush.xpose.msra.mxu0 0.0
        %440 = vmatpush.xpose.msra.mxu0 0.0
        %441 = vmatpush.xpose.msra.mxu0 0.0
        %442 = vmatpush.xpose.msra.mxu0 0.0
        %443 = vmatpush.xpose.msra.mxu0 0.0
        %444 = vmatpush.xpose.msra.mxu0 0.0
        %445 = vmatpush.xpose.msra.mxu0 0.0
        %446 = vmatpush.xpose.msra.mxu0 0.0
        %447 = vmatpush.xpose.msra.mxu0 0.0
        %448 = vmatpush.xpose.msra.mxu0 0.0
        %449 = vmatpush.xpose.msra.mxu0 %v432
        %450 = vmatmul.f32.gmra.mxu0 %v429
        %v451 = vpop.f32.mrf.mxu0
        %v452 = vadd.f32 0.0, %v451
        %453 = vdwg.mxu0
        %v454 = vsel %vm427, %v452, -inf
        %455 = vmax.xlane.f32.xlu0 %v454
        %v456 = vpop.xlane.xlu0 %455
        %v457 = vsub.f32 %v452, %v456
        %v458 = vmul.f32 %v457, 1.442695
        %v459 = vpow.pop %v458
        %v460 = vsel %vm427, %v459, 0.0
        %461 = vadd.xlane.f32.xlu0 %v460
        %v462 = vpop.xlane.xlu0 %461
        %463 = vrot.lane.b32.xlu0 %v394, 96
        %v464 = vpop.permute.xlu0 %463
        %v467 = vsel %vm427, %v459, 0
        %469 = vmatpush.msra.mxu0 0.0
        %470 = vmatpush.msra.mxu0 0.0
        %471 = vmatpush.msra.mxu0 0.0
        %472 = vmatpush.msra.mxu0 0.0
        %473 = vmatpush.msra.mxu0 0.0
        %474 = vmatpush.msra.mxu0 0.0
        %475 = vmatpush.msra.mxu0 0.0
        %476 = vmatpush.msra.mxu0 0.0
        %477 = vmatpush.msra.mxu0 0.0
        %478 = vmatpush.msra.mxu0 0.0
        %479 = vmatpush.msra.mxu0 0.0
        %480 = vmatpush.msra.mxu0 0.0
        %481 = vmatpush.msra.mxu0 0.0
        %482 = vmatpush.msra.mxu0 0.0
        %483 = vmatpush.msra.mxu0 0.0
        %484 = vmatpush.msra.mxu0 %v464
        %485 = vmatmul.f32.gmra.mxu0 %v467
        %v486 = vpop.f32.mrf.mxu0
        %v487 = vadd.f32 0.0, %v486
        %488 = vdwg.mxu0
        %v489 = vrcp.pop %v462
        %v490 = vmul.f32 %v462, %v489
        %v491 = vsub.f32 1.0, %v490
        %v492 = vmul.f32 %v489, %v491
        %v493 = vadd.f32 %v489, %v492
        %vm494 = vweird.f32 %v462
        %vm495 = vweird.f32 %v489
        %vm496 = vmor %vm494, %vm495
        %v497 = vsel %vm496, %v489, %v493
        %v498 = vand.u32 2147483647, %v462
        %vm499 = vcmp.eq.f32.partialorder %v498, 8.507059e+37
        %v500 = vand.u32 %v462, 2147483648
        %v501 = vor.u32 1.1754944e-38, %v500
        %v502 = vsel %vm499, %v501, %v497
        %v503 = vmul.f32 %v487, %v502
        %504 = vrot.lane.b32.xlu0 %v425, 120
        %v505 = vpop.permute.xlu0 %504
        %506 = vrot.lane.b32.xlu0 %v394, 120
        %v507 = vpop.permute.xlu0 %506
        %v508 = vsel %vm427, %v505, 0
        %v510 = vsel %vm427, %v507, 0
        %512 = vmatpush.xpose.msra.mxu0 0.0
        %513 = vmatpush.xpose.msra.mxu0 0.0
        %514 = vmatpush.xpose.msra.mxu0 0.0
        %515 = vmatpush.xpose.msra.mxu0 0.0
        %516 = vmatpush.xpose.msra.mxu0 0.0
        %517 = vmatpush.xpose.msra.mxu0 0.0
        %518 = vmatpush.xpose.msra.mxu0 0.0
        %519 = vmatpush.xpose.msra.mxu0 0.0
        %520 = vmatpush.xpose.msra.mxu0 0.0
        %521 = vmatpush.xpose.msra.mxu0 0.0
        %522 = vmatpush.xpose.msra.mxu0 0.0
        %523 = vmatpush.xpose.msra.mxu0 0.0
        %524 = vmatpush.xpose.msra.mxu0 0.0
        %525 = vmatpush.xpose.msra.mxu0 0.0
        %526 = vmatpush.xpose.msra.mxu0 0.0
        %527 = vmatpush.xpose.msra.mxu0 %v510
        %528 = vmatmul.f32.gmra.mxu0 %v508
        %v529 = vpop.f32.mrf.mxu0
        %v530 = vadd.f32 0.0, %v529
        %531 = vdwg.mxu0
        %v532 = vsel %vm427, %v530, -inf
        %533 = vmax.xlane.f32.xlu0 %v532
        %v534 = vpop.xlane.xlu0 %533
        %v535 = vsub.f32 %v530, %v534
        %v536 = vmul.f32 %v535, 1.442695
        %v537 = vpow.pop %v536
        %v538 = vsel %vm427, %v537, 0.0
        %539 = vadd.xlane.f32.xlu0 %v538
        %v540 = vpop.xlane.xlu0 %539
        %541 = vrot.lane.b32.xlu0 %v394, 88
        %v542 = vpop.permute.xlu0 %541
        %v545 = vsel %vm427, %v537, 0
        %547 = vmatpush.msra.mxu0 0.0
        %548 = vmatpush.msra.mxu0 0.0
        %549 = vmatpush.msra.mxu0 0.0
        %550 = vmatpush.msra.mxu0 0.0
        %551 = vmatpush.msra.mxu0 0.0
        %552 = vmatpush.msra.mxu0 0.0
        %553 = vmatpush.msra.mxu0 0.0
        %554 = vmatpush.msra.mxu0 0.0
        %555 = vmatpush.msra.mxu0 0.0
        %556 = vmatpush.msra.mxu0 0.0
        %557 = vmatpush.msra.mxu0 0.0
        %558 = vmatpush.msra.mxu0 0.0
        %559 = vmatpush.msra.mxu0 0.0
        %560 = vmatpush.msra.mxu0 0.0
        %561 = vmatpush.msra.mxu0 0.0
        %562 = vmatpush.msra.mxu0 %v542
        %563 = vmatmul.f32.gmra.mxu0 %v545
        %v564 = vpop.f32.mrf.mxu0
        %v565 = vadd.f32 0.0, %v564
        %566 = vdwg.mxu0
        %v567 = vrcp.pop %v540
        %v568 = vmul.f32 %v540, %v567
        %v569 = vsub.f32 1.0, %v568
        %v570 = vmul.f32 %v567, %v569
        %v571 = vadd.f32 %v567, %v570
        %vm572 = vweird.f32 %v540
        %vm573 = vweird.f32 %v567
        %vm574 = vmor %vm572, %vm573
        %v575 = vsel %vm574, %v567, %v571
        %v576 = vand.u32 2147483647, %v540
        %vm577 = vcmp.eq.f32.partialorder %v576, 8.507059e+37
        %v578 = vand.u32 %v540, 2147483648
        %v579 = vor.u32 1.1754944e-38, %v578
        %v580 = vsel %vm577, %v579, %v575
        %v581 = vmul.f32 %v565, %v580
        %582 = vrot.lane.b32.xlu0 %v425, 112
        %v583 = vpop.permute.xlu0 %582
        %584 = vrot.lane.b32.xlu0 %v394, 112
        %v585 = vpop.permute.xlu0 %584
        %v586 = vsel %vm427, %v583, 0
        %v588 = vsel %vm427, %v585, 0
        %590 = vmatpush.xpose.msra.mxu0 0.0
        %591 = vmatpush.xpose.msra.mxu0 0.0
        %592 = vmatpush.xpose.msra.mxu0 0.0
        %593 = vmatpush.xpose.msra.mxu0 0.0
        %594 = vmatpush.xpose.msra.mxu0 0.0
        %595 = vmatpush.xpose.msra.mxu0 0.0
        %596 = vmatpush.xpose.msra.mxu0 0.0
        %597 = vmatpush.xpose.msra.mxu0 0.0
        %598 = vmatpush.xpose.msra.mxu0 0.0
        %599 = vmatpush.xpose.msra.mxu0 0.0
        %600 = vmatpush.xpose.msra.mxu0 0.0
        %601 = vmatpush.xpose.msra.mxu0 0.0
        %602 = vmatpush.xpose.msra.mxu0 0.0
        %603 = vmatpush.xpose.msra.mxu0 0.0
        %604 = vmatpush.xpose.msra.mxu0 0.0
        %605 = vmatpush.xpose.msra.mxu0 %v588
        %606 = vmatmul.f32.gmra.mxu0 %v586
        %v607 = vpop.f32.mrf.mxu0
        %v608 = vadd.f32 0.0, %v607
        %609 = vdwg.mxu0
        %v610 = vsel %vm427, %v608, -inf
        %611 = vmax.xlane.f32.xlu0 %v610
        %v612 = vpop.xlane.xlu0 %611
        %v613 = vsub.f32 %v608, %v612
        %v614 = vmul.f32 %v613, 1.442695
        %v615 = vpow.pop %v614
        %v616 = vsel %vm427, %v615, 0.0
        %617 = vadd.xlane.f32.xlu0 %v616
        %v618 = vpop.xlane.xlu0 %617
        %619 = vrot.lane.b32.xlu0 %v394, 80
        %v620 = vpop.permute.xlu0 %619
        %v623 = vsel %vm427, %v615, 0
        %625 = vmatpush.msra.mxu0 0.0
        %626 = vmatpush.msra.mxu0 0.0
        %627 = vmatpush.msra.mxu0 0.0
        %628 = vmatpush.msra.mxu0 0.0
        %629 = vmatpush.msra.mxu0 0.0
        %630 = vmatpush.msra.mxu0 0.0
        %631 = vmatpush.msra.mxu0 0.0
        %632 = vmatpush.msra.mxu0 0.0
        %633 = vmatpush.msra.mxu0 0.0
        %634 = vmatpush.msra.mxu0 0.0
        %635 = vmatpush.msra.mxu0 0.0
        %636 = vmatpush.msra.mxu0 0.0
        %637 = vmatpush.msra.mxu0 0.0
        %638 = vmatpush.msra.mxu0 0.0
        %639 = vmatpush.msra.mxu0 0.0
        %640 = vmatpush.msra.mxu0 %v620
        %641 = vmatmul.f32.gmra.mxu0 %v623
        %v642 = vpop.f32.mrf.mxu0
        %v643 = vadd.f32 0.0, %v642
        %644 = vdwg.mxu0
        %v645 = vrcp.pop %v618
        %v646 = vmul.f32 %v618, %v645
        %v647 = vsub.f32 1.0, %v646
        %v648 = vmul.f32 %v645, %v647
        %v649 = vadd.f32 %v645, %v648
        %vm650 = vweird.f32 %v618
        %vm651 = vweird.f32 %v645
        %vm652 = vmor %vm650, %vm651
        %v653 = vsel %vm652, %v645, %v649
        %v654 = vand.u32 2147483647, %v618
        %vm655 = vcmp.eq.f32.partialorder %v654, 8.507059e+37
        %v656 = vand.u32 %v618, 2147483648
        %v657 = vor.u32 1.1754944e-38, %v656
        %v658 = vsel %vm655, %v657, %v653
        %v659 = vmul.f32 %v643, %v658
        %660 = vrot.lane.b32.xlu0 %v425, 104
        %v661 = vpop.permute.xlu0 %660
        %662 = vrot.lane.b32.xlu0 %v394, 104
        %v663 = vpop.permute.xlu0 %662
        %v664 = vsel %vm427, %v661, 0
        %v666 = vsel %vm427, %v663, 0
        %668 = vmatpush.xpose.msra.mxu0 0.0
        %669 = vmatpush.xpose.msra.mxu0 0.0
        %670 = vmatpush.xpose.msra.mxu0 0.0
        %671 = vmatpush.xpose.msra.mxu0 0.0
        %672 = vmatpush.xpose.msra.mxu0 0.0
        %673 = vmatpush.xpose.msra.mxu0 0.0
        %674 = vmatpush.xpose.msra.mxu0 0.0
        %675 = vmatpush.xpose.msra.mxu0 0.0
        %676 = vmatpush.xpose.msra.mxu0 0.0
        %677 = vmatpush.xpose.msra.mxu0 0.0
        %678 = vmatpush.xpose.msra.mxu0 0.0
        %679 = vmatpush.xpose.msra.mxu0 0.0
        %680 = vmatpush.xpose.msra.mxu0 0.0
        %681 = vmatpush.xpose.msra.mxu0 0.0
        %682 = vmatpush.xpose.msra.mxu0 0.0
        %683 = vmatpush.xpose.msra.mxu0 %v666
        %684 = vmatmul.f32.gmra.mxu0 %v664
        %v685 = vpop.f32.mrf.mxu0
        %v686 = vadd.f32 0.0, %v685
        %687 = vdwg.mxu0
        %v688 = vsel %vm427, %v686, -inf
        %689 = vmax.xlane.f32.xlu0 %v688
        %v690 = vpop.xlane.xlu0 %689
        %v691 = vsub.f32 %v686, %v690
        %v692 = vmul.f32 %v691, 1.442695
        %v693 = vpow.pop %v692
        %v694 = vsel %vm427, %v693, 0.0
        %695 = vadd.xlane.f32.xlu0 %v694
        %v696 = vpop.xlane.xlu0 %695
        %697 = vrot.lane.b32.xlu0 %v394, 72
        %v698 = vpop.permute.xlu0 %697
        %v701 = vsel %vm427, %v693, 0
        %703 = vmatpush.msra.mxu0 0.0
        %704 = vmatpush.msra.mxu0 0.0
        %705 = vmatpush.msra.mxu0 0.0
        %706 = vmatpush.msra.mxu0 0.0
        %707 = vmatpush.msra.mxu0 0.0
        %708 = vmatpush.msra.mxu0 0.0
        %709 = vmatpush.msra.mxu0 0.0
        %710 = vmatpush.msra.mxu0 0.0
        %711 = vmatpush.msra.mxu0 0.0
        %712 = vmatpush.msra.mxu0 0.0
        %713 = vmatpush.msra.mxu0 0.0
        %714 = vmatpush.msra.mxu0 0.0
        %715 = vmatpush.msra.mxu0 0.0
        %716 = vmatpush.msra.mxu0 0.0
        %717 = vmatpush.msra.mxu0 0.0
        %718 = vmatpush.msra.mxu0 %v698
        %719 = vmatmul.f32.gmra.mxu0 %v701
        %v720 = vpop.f32.mrf.mxu0
        %v721 = vadd.f32 0.0, %v720
        %722 = vdwg.mxu0
        %v723 = vrcp.pop %v696
        %v724 = vmul.f32 %v696, %v723
        %v725 = vsub.f32 1.0, %v724
        %v726 = vmul.f32 %v723, %v725
        %v727 = vadd.f32 %v723, %v726
        %vm728 = vweird.f32 %v696
        %vm729 = vweird.f32 %v723
        %vm730 = vmor %vm728, %vm729
        %v731 = vsel %vm730, %v723, %v727
        %v732 = vand.u32 2147483647, %v696
        %vm733 = vcmp.eq.f32.partialorder %v732, 8.507059e+37
        %v734 = vand.u32 %v696, 2147483648
        %v735 = vor.u32 1.1754944e-38, %v734
        %v736 = vsel %vm733, %v735, %v731
        %v737 = vmul.f32 %v721, %v736
        %739 = vrot.lane.b32.xlu0 %v581, 8
        %v740 = vpop.permute.xlu0 %739
        %743 = vrot.lane.b32.xlu0 %v659, 16
        %v744 = vpop.permute.xlu0 %743
        %747 = vrot.lane.b32.xlu0 %v737, 24
        %v748 = vpop.permute.xlu0 %747
        %v750 = vsel %vm427, %v503, %v740
        %vm751 = vcmask 130048
        %v752 = vsel %vm751, %v750, %v744
        %vm753 = vcmask 195584
        %v754 = vsel %vm753, %v752, %v748
        %v755 = vld [vmem:[#allocation8] sm:$0xff]
        %v756 = vld [vmem:[#allocation8 + $0x8] sm:$0xff]
        %v757 = vld [vmem:[#allocation8 + $0x10] sm:$0xff]
        %v758 = vld [vmem:[#allocation8 + $0x18] sm:$0xff]
        %v759 = vld [vmem:[%s6] sm:$0x1]
        %v761 = vperm.slane %v759, 0
        %v764 = vsel %vm372, %v754, 0
        %766 = vmatpush.msra.mxu0 0.0
        %767 = vmatpush.msra.mxu0 0.0
        %768 = vmatpush.msra.mxu0 0.0
        %769 = vmatpush.msra.mxu0 0.0
        %770 = vmatpush.msra.mxu0 0.0
        %771 = vmatpush.msra.mxu0 0.0
        %772 = vmatpush.msra.mxu0 0.0
        %773 = vmatpush.msra.mxu0 0.0
        %774 = vmatpush.msra.mxu0 0.0
        %775 = vmatpush.msra.mxu0 0.0
        %776 = vmatpush.msra.mxu0 0.0
        %777 = vmatpush.msra.mxu0 0.0
        %778 = vmatpush.msra.mxu0 %v758
        %779 = vmatpush.msra.mxu0 %v757
        %780 = vmatpush.msra.mxu0 %v756
        %781 = vmatpush.msra.mxu0 %v755
        %782 = vmatmul.f32.gmra.mxu0 %v764
        %v783 = vpop.f32.mrf.mxu0
        %v784 = vadd.f32 %v761, %v783
        %785 = vdwg.mxu0
        %786 = vst.msk [vmem:[%s359] sm:$0xff] %vm372, %v784
        %s787 = sand.u32 %s200, 1
        %s788 = scalar_lea.sflag [#allocation4], %s787
        %s789 = sand.u32 %s200, 1
        %s790 = smul.addr %s789, 8
        %s791 = scalar_lea.vmem [#allocation10], %s790
        // Predicated region
        $region65: #{tpu_custom_call.1} parent=47 // pred_check
          %p792 = pneg %p210
        $region66: #{tpu_custom_call.1} parent=47 // pred_check_branch
          %794 = sbr.rel (%p792) target = $region68
        $region67: #{tpu_custom_call.1} parent=47 // pred_region
          %796 = vsyncadd %s788, 0
          %s797 = sadd.s32 %s31, %s30
          %s798 = smul.addr %s797, 8
          %s799 = scalar_lea.hbm %s7, %s798
          %s801 = sshll.u32 %s791, 4
          %s802 = int_to_ptr.vmem [resolvable:$true] %s801
          %s803 = sshll.u32 %s799, 4
          %s804 = int_to_ptr.hbm [resolvable:$true] %s803
          %806 = dma.vmem_to_hbm [thread:$0]  %s802, 128, %s804, %s788
        $region68: #{tpu_custom_call.1} parent=47 // pred_fallthru
          _
      $region48: #{tpu_custom_call.1} parent=5 // pred_fallthru
        _
      %p807 = scmp.le.s32.totalorder 2, %s21
      // Predicated region
      $region69: #{tpu_custom_call.1} parent=5 // pred_check
        %p808 = pneg %p807
      $region70: #{tpu_custom_call.1} parent=5 // pred_check_branch
        %810 = sbr.rel (%p808) target = $region72
      $region71: #{tpu_custom_call.1} parent=5 // pred_region
        %s811 = ssub.s32 %s21, 2
        // Predicated region
        $region73: #{tpu_custom_call.1} parent=71 // pred_check
          %p812 = pneg %p216
        $region74: #{tpu_custom_call.1} parent=71 // pred_check_branch
          %814 = sbr.rel (%p812) target = $region76
        $region75: #{tpu_custom_call.1} parent=71 // pred_region
          %s815 = sand.u32 %s201, 1
          %s816 = scalar_lea.sflag [#allocation4], %s815
          %s817 = sand.u32 %s201, 1
          %s818 = smul.addr %s817, 8
          %s819 = scalar_lea.vmem [#allocation10], %s818
          %821 = dma.done %s816, 128
        $region76: #{tpu_custom_call.1} parent=71 // pred_fallthru
          _
      $region72: #{tpu_custom_call.1} parent=5 // pred_fallthru
        _
    $region6: #{tpu_custom_call.1} parent=1 // loop_footer
      %s25 = sadd.s32 1, %s21
    $region7: #{tpu_custom_call.1} parent=1 // loop_footer_branch
      %20 = sbr.rel target = $region3
    $region8: #{tpu_custom_call.1} parent=1 // loop_exit
      _
    %822 = vsyncpa [#allocation3], 1
    %s823 = scalar_lea.sflag [#allocation3], 1
    %824 = vsyncpa %s823, 1
    %825 = vsyncpa [#allocation6], 1
    %826 = vsyncpa [#allocation9], 1
    %827 = vsyncpa [#allocation4], 1
    %s828 = scalar_lea.sflag [#allocation4], 1
    %829 = vsyncpa %s828, 1

</llo_original>
